<compile_context>
chip_gen: v7x
topology: tpu7x:2x2x1
jax: 0.10.0
libtpu: 0.0.40
codegen_flags: <defaults>
</compile_context>

<pallas_src>
import jax
import jax.numpy as jnp
from jax.experimental import pallas as pl
from jax.experimental.pallas import tpu as pltpu


def _round_up(v, m):
    return (v + m - 1) // m * m


def _patch_embed_kernel(p_ref, w_ref, pos_ref, o_ref):
    # p_ref  : (1, TILE_N, K)  bf16  im2col rows for one (batch, row-tile)
    # w_ref  : (K, Cp)         bf16  projection weight (grid-invariant)
    # pos_ref: (TILE_N, Cp)    f32   pos_embed + conv bias (pre-folded)
    # o_ref  : (1, TILE_N, Cp) out dtype
    acc = jnp.dot(p_ref[0], w_ref[...], preferred_element_type=jnp.float32)
    o_ref[0] = (acc + pos_ref[...]).astype(o_ref.dtype)


def _extract_patches(x, patch_size, stride, pad):
    """im2col -> (B, Hout*Wout, Cin*ps*ps).  Zero FLOPs; feature dim ordered
    (Cin, kh, kw) (channel slowest), matching weight.reshape(Cout, K)."""
    B, Cin, Hin, Win = x.shape
    Hout = (Hin + 2 * pad - patch_size) // stride + 1
    Wout = (Win + 2 * pad - patch_size) // stride + 1
    patches = jax.lax.conv_general_dilated_patches(
        x,
        filter_shape=(patch_size, patch_size),
        window_strides=(stride, stride),
        padding=[(pad, pad), (pad, pad)],
        dimension_numbers=("NCHW", "OIHW", "NHWC"))      # (B, Ho, Wo, Cin*ps*ps)
    K = Cin * patch_size * patch_size
    return patches.reshape(B, Hout * Wout, K), Hout, Wout


def patch_embed(x, weight, bias, pos_embed, *, patch_size, stride, tile_n=256):
    """x: (B, Cin, H, W); weight: torch conv layout (Cout, Cin, ps, ps);
    bias: (Cout,); pos_embed: (1, num_patches, Cout)."""
    B, Cin, Hin, Win = x.shape
    Cout = weight.shape[0]
    pad = patch_size // 2
    out_dtype = x.dtype

    # ---- prologue: bf16 patch extraction (layout only) -------------------
    patches, Hout, Wout = _extract_patches(
        x.astype(jnp.bfloat16), patch_size, stride, pad)
    N = Hout * Wout
    K = Cin * patch_size * patch_size     # left unpadded (full-dim block is legal)

    # Row (patch) tiling: 256-row tiles at real resolutions, whole-N (rounded
    # to a sublane multiple) when N is small.
    tn = tile_n if N >= tile_n else _round_up(N, 8)
    Np = _round_up(N, tn)
    n_tiles = Np // tn

    # Lane-dense output: pad embed dim to a multiple of 128 (no-op for 256).
    Cp = _round_up(Cout, 128)

    if Np != N:
        patches = jnp.pad(patches, ((0, 0), (0, Np - N), (0, 0)))

    w_mat = weight.reshape(Cout, K).T.astype(jnp.bfloat16)          # (K, Cout)
    # Fold the conv bias into the positional embedding (one less input stream).
    pos_b = (pos_embed.reshape(N, Cout).astype(jnp.float32)
             + bias.reshape(1, Cout).astype(jnp.float32))
    if Cp != Cout:
        w_mat = jnp.pad(w_mat, ((0, 0), (0, Cp - Cout)))
        pos_b = jnp.pad(pos_b, ((0, 0), (0, Cp - Cout)))
    if Np != N:
        pos_b = jnp.pad(pos_b, ((0, Np - N), (0, 0)))

    itemsize_out = jnp.dtype(out_dtype).itemsize
    bytes_accessed = (B * Np * K * 2          # bf16 patches
                      + K * Cp * 2            # bf16 weight (resident)
                      + B * Np * Cp * 4       # f32 pos (+bias), re-read per batch
                      + B * Np * Cp * itemsize_out)

    out = pl.pallas_call(
        _patch_embed_kernel,
        out_shape=jax.ShapeDtypeStruct((B, Np, Cp), out_dtype),
        grid_spec=pltpu.PrefetchScalarGridSpec(
            num_scalar_prefetch=0,
            grid=(B, n_tiles),
            in_specs=[
                pl.BlockSpec((1, tn, K), lambda b, n: (b, n, 0)),
                pl.BlockSpec((K, Cp), lambda b, n: (0, 0)),
                pl.BlockSpec((tn, Cp), lambda b, n: (n, 0)),
            ],
            out_specs=pl.BlockSpec((1, tn, Cp), lambda b, n: (b, n, 0)),
        ),
        compiler_params=pltpu.CompilerParams(
            dimension_semantics=("parallel", "parallel"),
            vmem_limit_bytes=32 * 1024 * 1024),
        cost_estimate=pl.CostEstimate(
            flops=2 * B * Np * K * Cp,
            transcendentals=0,
            bytes_accessed=int(bytes_accessed)),
    )(patches, w_mat, pos_b)

    if Np != N or Cp != Cout:
        out = out[:, :N, :Cout]
    return out


def _reference(x, weight, bias, pos_embed, *, patch_size, stride):
    """Independent pure-JAX (f32) replica of the PyTorch forward."""
    pad = patch_size // 2
    out = jax.lax.conv_general_dilated(
        x, weight, window_strides=(stride, stride),
        padding=[(pad, pad), (pad, pad)],
        dimension_numbers=("NCHW", "OIHW", "NCHW"))
    out = out + bias.reshape(1, -1, 1, 1)
    B, C, H, W = out.shape
    out = out.transpose(0, 2, 3, 1).reshape(B, H * W, C)
    return out + pos_embed


if __name__ == "__main__":
    # Small shapes consistent with the module: img=16, patch=7, stride=4,
    # in_chans=3, embed_dim=256 (module default) -> H=W=4, num_patches=16.
    B, Cin, img_size = 2, 3, 16
    patch_size, stride = 7, 4
    embed_dim = 256
    pad = patch_size // 2
    H = W = (img_size + 2 * pad - patch_size) // stride + 1
    N = H * W

    key = jax.random.PRNGKey(0)
    kx, kw, kb, kp = jax.random.split(key, 4)
    x = jax.random.normal(kx, (B, Cin, img_size, img_size), dtype=jnp.float32)
    # torch layout: (out_channels, in_channels, kh, kw)
    weight = 0.05 * jax.random.normal(
        kw, (embed_dim, Cin, patch_size, patch_size), dtype=jnp.float32)
    # module inits bias to 0; use a nonzero bias to exercise the fold path
    bias = 0.05 * jax.random.normal(kb, (embed_dim,), dtype=jnp.float32)
    pos_embed = 0.02 * jax.random.normal(kp, (1, N, embed_dim), dtype=jnp.float32)

    out = patch_embed(x, weight, bias, pos_embed,
                      patch_size=patch_size, stride=stride)
    out = jax.block_until_ready(out)

    ref = _reference(x, weight, bias, pos_embed,
                     patch_size=patch_size, stride=stride)
    assert out.shape == (B, N, embed_dim)
    # bf16 matmul operands with f32 accumulation -> loosened tolerance.
    assert jnp.allclose(out, ref, atol=3e-2, rtol=3e-2), "mismatch vs reference"

    print("KERNEL_OK")
</pallas_src>

<mosaic_0001>
module attributes {stable_mosaic.version = 11 : i64} {
  func.func @_patch_embed_kernel(%arg0: i32, %arg1: i32, %arg2: memref<1x16x147xbf16, #tpu.memory_space<vmem>>, %arg3: memref<147x256xbf16, #tpu.memory_space<vmem>>, %arg4: memref<16x256xf32, #tpu.memory_space<vmem>>, %arg5: memref<1x16x256xf32, #tpu.memory_space<vmem>>) attributes {dimension_semantics = [#tpu.dimension_semantics<parallel>, #tpu.dimension_semantics<parallel>], iteration_bounds = array<i64: 2, 1>, scalar_prefetch = 0 : i64, scratch_operands = 0 : i64, tpu.core_type = #tpu.core_type<tc>, window_params = [{transform_indices = @transform_0, window_bounds = array<i64: 1, 16, 147>}, {pipeline_mode = #tpu.pipeline_mode<synchronous>, transform_indices = @transform_1, window_bounds = array<i64: 147, 256>}, {transform_indices = @transform_2, window_bounds = array<i64: 16, 256>}, {transform_indices = @transform_3, window_bounds = array<i64: 1, 16, 256>}]} {
    %c0 = arith.constant 0 : index
    %c0_0 = arith.constant 0 : index
    %c0_1 = arith.constant 0 : index
    %0 = vector.load %arg2[%c0, %c0_0, %c0_1] : memref<1x16x147xbf16, #tpu.memory_space<vmem>>, vector<1x16x147xbf16>
    %1 = vector.shape_cast %0 : vector<1x16x147xbf16> to vector<16x147xbf16>
    %c0_2 = arith.constant 0 : index
    %c0_3 = arith.constant 0 : index
    %2 = vector.load %arg3[%c0_2, %c0_3] : memref<147x256xbf16, #tpu.memory_space<vmem>>, vector<147x256xbf16>
    %cst = arith.constant dense<0.000000e+00> : vector<16x256xf32>
    %3 = tpu.matmul %1, %2, %cst {dimension_numbers = #tpu.dot_dimension_numbers<[1], [0], [0], [1], [0, 0, 1, 1], [], []>} : vector<16x147xbf16>, vector<147x256xbf16>, vector<16x256xf32> -> vector<16x256xf32>
    %c0_4 = arith.constant 0 : index
    %c0_5 = arith.constant 0 : index
    %4 = vector.load %arg4[%c0_4, %c0_5] : memref<16x256xf32, #tpu.memory_space<vmem>>, vector<16x256xf32>
    %5 = arith.addf %3, %4 : vector<16x256xf32>
    %c0_6 = arith.constant 0 : index
    %c0_7 = arith.constant 0 : index
    %c0_8 = arith.constant 0 : index
    %6 = vector.load %arg5[%c0_6, %c0_7, %c0_8] : memref<1x16x256xf32, #tpu.memory_space<vmem>>, vector<1x16x256xf32>
    %7 = vector.shape_cast %6 : vector<1x16x256xf32> to vector<16x256xf32>
    %8 = vector.shape_cast %5 : vector<16x256xf32> to vector<1x16x256xf32>
    tpu.vector_store %arg5[%c0_6, %c0_7, %c0_8], %8 {strides = array<i32>} : memref<1x16x256xf32, #tpu.memory_space<vmem>>, vector<1x16x256xf32>,
    return
  }
  func.func @transform_0(%arg0: i32, %arg1: i32) -> (i32, i32, i32) {
    %c0_i32 = arith.constant 0 : i32
    %c0_i32_0 = arith.constant 0 : i32
    return %arg0, %arg1, %c0_i32 : i32, i32, i32
  }
  func.func @transform_1(%arg0: i32, %arg1: i32) -> (i32, i32) {
    %c0_i32 = arith.constant 0 : i32
    %c0_i32_0 = arith.constant 0 : i32
    %c0_i32_1 = arith.constant 0 : i32
    return %c0_i32, %c0_i32_0 : i32, i32
  }
  func.func @transform_2(%arg0: i32, %arg1: i32) -> (i32, i32) {
    %c0_i32 = arith.constant 0 : i32
    %c0_i32_0 = arith.constant 0 : i32
    return %arg1, %c0_i32 : i32, i32
  }
  func.func @transform_3(%arg0: i32, %arg1: i32) -> (i32, i32, i32) {
    %c0_i32 = arith.constant 0 : i32
    %c0_i32_0 = arith.constant 0 : i32
    return %arg0, %arg1, %c0_i32 : i32, i32, i32
  }
}

</mosaic_0001>

<llo_original>
// kernel: tpu_custom_call.1
$region0: #{tpu_custom_call.1}
  #allocation0 [shape = 'u32[]', space=smem, size = 0x4, offset = 0x4, fixed_abs, tag = 'smem constant byte address 0x4 - core index']
  #allocation1 [shape = 'u32[144,128]{1,0:T(1,128)}', space=vmem, size = 0x12000, scoped, tag = 'internal scratch']
  %s0 = inlined_call_operand.hbm [shape: bf16[2,16,147], index: 0, kind: input, shape index: {}]
  %s1 = inlined_call_operand.hbm [shape: bf16[147,256], index: 1, kind: input, shape index: {}]
  %s2 = inlined_call_operand.hbm [shape: f32[16,256], index: 2, kind: input, shape index: {}]
  %s3 = inlined_call_operand.hbm [shape: f32[2,16,256], index: 3, kind: output, shape index: {}]
  %s4 = sld [smem:[#allocation0]]
  $region57: #{tpu_custom_call.1} parent=0
    _
  %s6 = ssub.s32 1, %s4
  %s7 = scalar_select 0, %s6, %s4
  $region1: #{tpu_custom_call.1} parent=0
    #allocation2 [shape = 'u8[16384]{0}', space=vmem, size = 0x4000, scoped, tag = 'input window, operand 0']
    #allocation3 [shape = 's32[2]{0}', space=sflag, size = 0x8, scoped, tag = 'scoped memory for tpu_custom_call.1']
    #allocation4 [shape = 's32[2]{0}', space=sflag, size = 0x8, scoped, tag = 'scoped memory for tpu_custom_call.1']
    #allocation5 [shape = 'u8[77824]{0}', space=vmem, size = 0x13000, scoped, tag = 'input window, operand 1, single buffered']
    #allocation6 [shape = 's32[1]{0}', space=sflag, size = 0x4, scoped, tag = 'scoped memory for tpu_custom_call.1']
    #allocation7 [shape = 'u8[16384]{0}', space=vmem, size = 0x4000, scoped, tag = 'input window, operand 2, single buffered']
    #allocation8 [shape = 'u8[32768]{0}', space=vmem, size = 0x8000, scoped, tag = 'output window, operand 0']
    %8 = vsyncpa [#allocation3], 0
    %s9 = scalar_lea.sflag [#allocation3], 1
    %10 = vsyncpa %s9, 0
    %11 = vsyncpa [#allocation6], 0
    %12 = vsyncpa [#allocation4], 0
    %s13 = scalar_lea.sflag [#allocation4], 1
    %14 = vsyncpa %s13, 0
    loop: start=0, step=1, limit=4
    $region2: #{tpu_custom_call.1} parent=1 // loop_pre_header
      _
    $region3: #{tpu_custom_call.1} parent=1 // loop_header
      %s16 = sphi 0, %s20
      %p17 = scmp.ge.s32.totalorder %s16, 4
      %s23 = sphi 0, %s35
      %s24 = sphi 0, %s31
      %s25 = sphi 0, %s23
      %s26 = sphi 0, %s24
      %s27 = sphi 0, %s25
      %s28 = sphi 0, %s26
      %s40 = sphi 0, %s42
      %s43 = sphi 0, %s40
      %s44 = sphi 0, %s43
      %s60 = sphi 0, %s44
      %s64 = sphi 0, %s64
      %s66 = sphi 0, %s64
      %s67 = sphi 0, %s66
      %s81 = sphi 0, %s67
      %s87 = sphi 0, %s89
      %s90 = sphi 0, %s87
      %s91 = sphi 0, %s90
      %s107 = sphi 0, %s91
      %s115 = sphi 0, %s117
      %s118 = sphi 0, %s115
      %s119 = sphi 0, %s118
      %s135 = sphi 0, %s119
    $region4: #{tpu_custom_call.1} parent=1 // loop_header_branch
      %19 = sbr.rel (%p17) target = $region8
    $region5: #{tpu_custom_call.1} parent=1 // loop_body
      %s21 = ssub.s32 %s16, 1
      %s22 = ssub.s32 %s16, 2
      %s29 = sadd.s32 1, %s24
      %p30 = scmp.ge.s32.totalorder %s29, 1
      %s31 = scalar_select %p30, 0, %s29
      %s32 = sadd.s32 1, %s23
      %s33 = scalar_select %p30, %s32, %s23
      %p34 = scmp.ge.s32.totalorder %s33, 2
      %s35 = scalar_select %p34, 0, %s33
      %s36 = ssub.s32 %s23, %s35
      %s37 = ssub.s32 %s24, %s31
      %s38 = sor.u32 %s36, %s37
      %p39 = scmp.eq.s32.totalorder %s38, 0
      %s41 = sadd.s32 %s40, 1
      %s42 = scalar_select %p39, %s40, %s41
      %p45 = pneg %p39
      %p46 = scmp.eq.s32.totalorder %s16, 1
      %p47 = por %p45, %p46
      %p48 = scmp.ne.s32.totalorder %s40, %s43
      %p49 = scmp.eq.s32.totalorder %s16, 0
      %p50 = por %p48, %p49
      %p51 = scmp.ne.s32.totalorder %s40, %s43
      %p52 = scmp.eq.s32.totalorder %s21, 1
      %p53 = por %p51, %p52
      %p54 = scmp.ne.s32.totalorder %s43, %s44
      %p55 = scmp.eq.s32.totalorder %s21, 0
      %p56 = por %p54, %p55
      %p57 = scmp.ne.s32.totalorder %s43, %s44
      %p58 = scmp.eq.s32.totalorder %s22, 1
      %p59 = por %p57, %p58
      %p61 = scmp.ne.s32.totalorder %s44, %s60
      %p62 = scmp.eq.s32.totalorder %s22, 0
      %p63 = por %p61, %p62
      %s65 = sadd.s32 %s64, 1
      %p68 = scmp.eq.s32.totalorder %s16, 1
      %p69 = scmp.ne.s32.totalorder %s64, %s66
      %p70 = scmp.eq.s32.totalorder %s16, 0
      %p71 = por %p69, %p70
      %p72 = scmp.ne.s32.totalorder %s64, %s66
      %p73 = scmp.eq.s32.totalorder %s21, 1
      %p74 = por %p72, %p73
      %p75 = scmp.ne.s32.totalorder %s66, %s67
      %p76 = scmp.eq.s32.totalorder %s21, 0
      %p77 = por %p75, %p76
      %p78 = scmp.ne.s32.totalorder %s66, %s67
      %p79 = scmp.eq.s32.totalorder %s22, 1
      %p80 = por %p78, %p79
      %p82 = scmp.ne.s32.totalorder %s67, %s81
      %p83 = scmp.eq.s32.totalorder %s22, 0
      %p84 = por %p82, %p83
      %s85 = ssub.s32 %s24, %s31
      %p86 = scmp.eq.s32.totalorder %s85, 0
      %s88 = sadd.s32 %s87, 1
      %s89 = scalar_select %p86, %s87, %s88
      %p92 = pneg %p86
      %p93 = scmp.eq.s32.totalorder %s16, 1
      %p94 = por %p92, %p93
      %p95 = scmp.ne.s32.totalorder %s87, %s90
      %p96 = scmp.eq.s32.totalorder %s16, 0
      %p97 = por %p95, %p96
      %p98 = scmp.ne.s32.totalorder %s87, %s90
      %p99 = scmp.eq.s32.totalorder %s21, 1
      %p100 = por %p98, %p99
      %p101 = scmp.ne.s32.totalorder %s90, %s91
      %p102 = scmp.eq.s32.totalorder %s21, 0
      %p103 = por %p101, %p102
      %p104 = scmp.ne.s32.totalorder %s90, %s91
      %p105 = scmp.eq.s32.totalorder %s22, 1
      %p106 = por %p104, %p105
      %p108 = scmp.ne.s32.totalorder %s91, %s107
      %p109 = scmp.eq.s32.totalorder %s22, 0
      %p110 = por %p108, %p109
      %s111 = ssub.s32 %s23, %s35
      %s112 = ssub.s32 %s24, %s31
      %s113 = sor.u32 %s111, %s112
      %p114 = scmp.eq.s32.totalorder %s113, 0
      %s116 = sadd.s32 %s115, 1
      %s117 = scalar_select %p114, %s115, %s116
      %p120 = pneg %p114
      %p121 = scmp.eq.s32.totalorder %s16, 1
      %p122 = por %p120, %p121
      %p123 = scmp.ne.s32.totalorder %s115, %s118
      %p124 = scmp.eq.s32.totalorder %s16, 0
      %p125 = por %p123, %p124
      %p126 = scmp.ne.s32.totalorder %s115, %s118
      %p127 = scmp.eq.s32.totalorder %s21, 1
      %p128 = por %p126, %p127
      %p129 = scmp.ne.s32.totalorder %s118, %s119
      %p130 = scmp.eq.s32.totalorder %s21, 0
      %p131 = por %p129, %p130
      %p132 = scmp.ne.s32.totalorder %s118, %s119
      %p133 = scmp.eq.s32.totalorder %s22, 1
      %p134 = por %p132, %p133
      %p136 = scmp.ne.s32.totalorder %s119, %s135
      %p137 = scmp.eq.s32.totalorder %s22, 0
      %p138 = por %p136, %p137
      %p139 = scmp.le.s32.totalorder 1, %s16
      %p140 = scmp.lt.s32.totalorder %s16, 3
      %p141 = pnand %p139, %p140
      %p142 = pneg %p141
      // Predicated region
      $region9: #{tpu_custom_call.1} parent=5 // pred_check
        _
      $region10: #{tpu_custom_call.1} parent=5 // pred_check_branch
        %144 = sbr.rel (%p141) target = $region12
      $region11: #{tpu_custom_call.1} parent=5 // pred_region
        %s145 = ssub.s32 %s16, 1
        // Predicated region
        $region13: #{tpu_custom_call.1} parent=11 // pred_check
          %p146 = pneg %p77
        $region14: #{tpu_custom_call.1} parent=11 // pred_check_branch
          %148 = sbr.rel (%p146) target = $region16
        $region15: #{tpu_custom_call.1} parent=11 // pred_region
          %s150 = ssub.s32 2432, 2432
          %151 = vsyncadd [#allocation6], %s150
          %s152 = sshll.u32 [#allocation5], 4
          %s153 = int_to_ptr.vmem [resolvable:$true] %s152
          %158 = dma.hbm_to_vmem [thread:$0]  %s1, 2432, %s153, [#allocation6], 128, 128, 8
        $region16: #{tpu_custom_call.1} parent=11 // pred_fallthru
          _
        // Predicated region
        $region17: #{tpu_custom_call.1} parent=11 // pred_check
          %p159 = pneg %p103
        $region18: #{tpu_custom_call.1} parent=11 // pred_check_branch
          %161 = sbr.rel (%p159) target = $region20
        $region19: #{tpu_custom_call.1} parent=11 // pred_region
          %s162 = smul.u32 2, %s26
          %s164 = ssub.s32 512, 512
          %165 = vsyncadd [#allocation6], %s164
          %s166 = smul.addr %s162, 2
          %s167 = smul.addr %s166, 128
          %s168 = scalar_lea.hbm %s2, %s167
          %s169 = sshll.u32 [#allocation7], 4
          %s170 = int_to_ptr.vmem [resolvable:$true] %s169
          %175 = dma.hbm_to_vmem [thread:$0]  %s168, 512, %s170, [#allocation6], 256, 256, 16
        $region20: #{tpu_custom_call.1} parent=11 // pred_fallthru
          _
      $region12: #{tpu_custom_call.1} parent=5 // pred_fallthru
        _
      %p176 = scmp.lt.s32.totalorder %s16, 2
      // Predicated region
      $region21: #{tpu_custom_call.1} parent=5 // pred_check
        %p177 = pneg %p176
      $region22: #{tpu_custom_call.1} parent=5 // pred_check_branch
        %179 = sbr.rel (%p177) target = $region24
      $region23: #{tpu_custom_call.1} parent=5 // pred_region
        // Predicated region
        $region25: #{tpu_custom_call.1} parent=23 // pred_check
          %p180 = pneg %p50
        $region26: #{tpu_custom_call.1} parent=23 // pred_check_branch
          %182 = sbr.rel (%p180) target = $region28
        $region27: #{tpu_custom_call.1} parent=23 // pred_region
          %s183 = sand.u32 %s40, 1
          %s184 = scalar_lea.sflag [#allocation3], %s183
          %s185 = sand.u32 %s40, 1
          %s186 = smul.addr %s185, 16
          %s187 = scalar_lea.vmem [#allocation2], %s186
          %s188 = smul.u32 2, %s24
          %s190 = ssub.s32 256, 256
          %191 = vsyncadd %s184, %s190
          %s192 = smul.addr %s188, 2
          %s193 = smul.addr %s23, 4
          %s194 = sadd.s32 %s192, %s193
          %s195 = smul.addr %s194, 64
          %s196 = scalar_lea.hbm %s0, %s195
          %s197 = sshll.u32 %s187, 4
          %s198 = int_to_ptr.vmem [resolvable:$true] %s197
          %203 = dma.hbm_to_vmem [thread:$0]  %s196, 256, %s198, %s184, 128, 128, 8
        $region28: #{tpu_custom_call.1} parent=23 // pred_fallthru
          _
      $region24: #{tpu_custom_call.1} parent=5 // pred_fallthru
        _
      %p204 = scmp.le.s32.totalorder 1, %s16
      %p205 = scmp.lt.s32.totalorder %s16, 3
      %p206 = pnand %p204, %p205
      %p207 = pneg %p206
      // Predicated region
      $region29: #{tpu_custom_call.1} parent=5 // pred_check
        _
      $region30: #{tpu_custom_call.1} parent=5 // pred_check_branch
        %209 = sbr.rel (%p206) target = $region32
      $region31: #{tpu_custom_call.1} parent=5 // pred_region
        %s210 = ssub.s32 %s16, 1
        %s211 = sand.u32 %s43, 1
        %s212 = scalar_lea.sflag [#allocation3], %s211
        %s213 = sand.u32 %s43, 1
        %s214 = smul.addr %s213, 16
        %s215 = scalar_lea.vmem [#allocation2], %s214
        // Predicated region
        $region33: #{tpu_custom_call.1} parent=31 // pred_check
          %p216 = pneg %p56
        $region34: #{tpu_custom_call.1} parent=31 // pred_check_branch
          %218 = sbr.rel (%p216) target = $region36
        $region35: #{tpu_custom_call.1} parent=31 // pred_region
          %219 = dma.done %s212, 256
        $region36: #{tpu_custom_call.1} parent=31 // pred_fallthru
          _
        // Predicated region
        $region37: #{tpu_custom_call.1} parent=31 // pred_check
          %p220 = pneg %p77
        $region38: #{tpu_custom_call.1} parent=31 // pred_check_branch
          %222 = sbr.rel (%p220) target = $region40
        $region39: #{tpu_custom_call.1} parent=31 // pred_region
          %223 = dma.done [#allocation6], 2432
        $region40: #{tpu_custom_call.1} parent=31 // pred_fallthru
          _
        // Predicated region
        $region41: #{tpu_custom_call.1} parent=31 // pred_check
          %p224 = pneg %p103
        $region42: #{tpu_custom_call.1} parent=31 // pred_check_branch
          %226 = sbr.rel (%p224) target = $region44
        $region43: #{tpu_custom_call.1} parent=31 // pred_region
          %227 = dma.done [#allocation6], 512
        $region44: #{tpu_custom_call.1} parent=31 // pred_fallthru
          _
        %s228 = sand.u32 %s43, 1
        %s229 = scalar_lea.sflag [#allocation3], %s228
        %s230 = sand.u32 %s43, 1
        %s231 = smul.addr %s230, 16
        %s232 = scalar_lea.vmem [#allocation2], %s231
        %p233 = pneg %p56
        %p234 = pneg %p53
        %p235 = pneg %p77
        %p236 = pneg %p74
        %p237 = pneg %p103
        %p238 = pneg %p100
        %p239 = pneg %p131
        %p240 = pneg %p128
        %s241 = sand.u32 %s118, 1
        %s242 = scalar_lea.sflag [#allocation4], %s241
        %s243 = sand.u32 %s118, 1
        %s244 = smul.addr %s243, 32
        %s245 = scalar_lea.vmem [#allocation8], %s244
        %s246 = smul.u32 2, %s26
        %s247 = smul.u32 2, %s26
        %s248 = smul.u32 2, %s26
        %v250 = vld [vmem:[%s215] sm:$0xff]
        %v251 = vld [vmem:[%s215 + $0x8] sm:$0xff]
        %v252 = vld [vmem:[#allocation5] sm:$0xff]
        %v253 = vld [vmem:[#allocation5 + $0x8] sm:$0xff]
        %v254 = vld [vmem:[#allocation5 + $0x10] sm:$0xff]
        %v255 = vld [vmem:[#allocation5 + $0x18] sm:$0xff]
        %v256 = vld [vmem:[#allocation5 + $0x20] sm:$0xff]
        %v257 = vld [vmem:[#allocation5 + $0x28] sm:$0xff]
        %v258 = vld [vmem:[#allocation5 + $0x30] sm:$0xff]
        %v259 = vld [vmem:[#allocation5 + $0x38] sm:$0xff]
        %v260 = vld [vmem:[#allocation5 + $0x40] sm:$0xff]
        %v261 = vld [vmem:[#allocation5 + $0x48] sm:$0xff]
        %v262 = vld [vmem:[#allocation5 + $0x50] sm:$0xff]
        %v263 = vld [vmem:[#allocation5 + $0x58] sm:$0xff]
        %v264 = vld [vmem:[#allocation5 + $0x60] sm:$0xff]
        %v265 = vld [vmem:[#allocation5 + $0x68] sm:$0xff]
        %v266 = vld [vmem:[#allocation5 + $0x70] sm:$0xff]
        %v267 = vld [vmem:[#allocation5 + $0x78] sm:$0xff]
        %v268 = vld [vmem:[#allocation5 + $0x80] sm:$0xff]
        %v269 = vld [vmem:[#allocation5 + $0x88] sm:$0xff]
        %v270 = vld [vmem:[#allocation5 + $0x90] sm:$0x33]
        %v271 = vld [vmem:[#allocation7] sm:$0xff]
        %v272 = vld [vmem:[#allocation7 + $0x8] sm:$0xff]
        %v273 = vld [vmem:[#allocation7 + $0x10] sm:$0xff]
        %v274 = vld [vmem:[#allocation7 + $0x18] sm:$0xff]
        %v277 = vunpack.c.l.b16 %v250
        %v278 = vunpack.c.h.b16 %v250
        %v279 = vunpack.c.l.b16 %v251
        %v280 = vunpack.c.h.b16 %v251
        %v281 = vpack.c.b16 %v279, %v277
        %v282 = vpack.c.b16 %v280, %v278
        %v303 = vunpack.c.l.b16 %v252
        %v304 = vunpack.c.h.b16 %v252
        %v305 = vunpack.c.l.b16 %v253
        %v306 = vunpack.c.h.b16 %v253
        %v307 = vunpack.c.l.b16 %v254
        %v308 = vunpack.c.h.b16 %v254
        %v309 = vunpack.c.l.b16 %v255
        %v310 = vunpack.c.h.b16 %v255
        %v311 = vunpack.c.l.b16 %v256
        %v312 = vunpack.c.h.b16 %v256
        %v313 = vunpack.c.l.b16 %v257
        %v314 = vunpack.c.h.b16 %v257
        %v315 = vunpack.c.l.b16 %v258
        %v316 = vunpack.c.h.b16 %v258
        %v317 = vunpack.c.l.b16 %v259
        %v318 = vunpack.c.h.b16 %v259
        %v319 = vunpack.c.l.b16 %v260
        %v320 = vunpack.c.h.b16 %v260
        %v321 = vunpack.c.l.b16 %v261
        %v322 = vunpack.c.h.b16 %v261
        %v323 = vunpack.c.l.b16 %v262
        %v324 = vunpack.c.h.b16 %v262
        %v325 = vunpack.c.l.b16 %v263
        %v326 = vunpack.c.h.b16 %v263
        %v327 = vunpack.c.l.b16 %v264
        %v328 = vunpack.c.h.b16 %v264
        %v329 = vunpack.c.l.b16 %v265
        %v330 = vunpack.c.h.b16 %v265
        %v331 = vunpack.c.l.b16 %v266
        %v332 = vunpack.c.h.b16 %v266
        %v333 = vunpack.c.l.b16 %v267
        %v334 = vunpack.c.h.b16 %v267
        %v335 = vunpack.c.l.b16 %v268
        %v336 = vunpack.c.h.b16 %v268
        %v337 = vunpack.c.l.b16 %v269
        %v338 = vunpack.c.h.b16 %v269
        %v339 = vunpack.c.l.b16 %v270
        %v340 = vunpack.c.h.b16 %v270
        %v341 = vpack.c.b16 %v305, %v303
        %v342 = vpack.c.b16 %v306, %v304
        %v343 = vpack.c.b16 %v309, %v307
        %v344 = vpack.c.b16 %v310, %v308
        %v345 = vpack.c.b16 %v313, %v311
        %v346 = vpack.c.b16 %v314, %v312
        %v347 = vpack.c.b16 %v317, %v315
        %v348 = vpack.c.b16 %v318, %v316
        %v349 = vpack.c.b16 %v321, %v319
        %v350 = vpack.c.b16 %v322, %v320
        %v351 = vpack.c.b16 %v325, %v323
        %v352 = vpack.c.b16 %v326, %v324
        %v353 = vpack.c.b16 %v329, %v327
        %v354 = vpack.c.b16 %v330, %v328
        %v355 = vpack.c.b16 %v333, %v331
        %v356 = vpack.c.b16 %v334, %v332
        %v357 = vpack.c.b16 %v337, %v335
        %v358 = vpack.c.b16 %v338, %v336
        %v359 = vpack.c.b16 %v339, %v339
        %v360 = vpack.c.b16 %v340, %v340
        %vm379 = vcmask 154624
        %v381 = vsel %vm379, %v282, 0
        %vm383 = vcmask 1040384
        %vm384 = vcmask 1041408
        %v385 = vsel %vm383, 4294967295, 65535
        %v386 = vsel %vm384, %v385, 0
        %v388 = vand.u32 %v359, %v386
        %v391 = vand.u32 %v360, %v386
        %393 = vmatprep.subr.bf16.mxu0 %v342
        %394 = vmatpush1.bf16.msra.mxu0 %v341
        %395 = vmatprep.subr.bf16.mxu0 %v344
        %396 = vmatpush1.bf16.msra.mxu0 %v343
        %397 = vmatprep.subr.bf16.mxu0 %v346
        %398 = vmatpush1.bf16.msra.mxu0 %v345
        %399 = vmatprep.subr.bf16.mxu0 %v348
        %400 = vmatpush1.bf16.msra.mxu0 %v347
        %401 = vmatprep.subr.bf16.mxu0 %v350
        %402 = vmatpush1.bf16.msra.mxu0 %v349
        %403 = vmatprep.subr.bf16.mxu0 %v352
        %404 = vmatpush1.bf16.msra.mxu0 %v351
        %405 = vmatprep.subr.bf16.mxu0 %v354
        %406 = vmatpush1.bf16.msra.mxu0 %v353
        %407 = vmatprep.subr.bf16.mxu0 %v356
        %408 = vmatpush1.bf16.msra.mxu0 %v355
        %409 = vmatprep.subr.bf16.mxu0 %v358
        %410 = vmatpush1.bf16.msra.mxu0 %v357
        %411 = vmatprep.subr.bf16.mxu0 %v391
        %412 = vmatpush1.bf16.msra.mxu0 %v388
        %413 = vmatprep.subr.bf16.mxu0 0
        %414 = vmatpush1.bf16.msra.mxu0 0
        %415 = vmatprep.subr.bf16.mxu0 0
        %416 = vmatpush1.bf16.msra.mxu0 0
        %417 = vmatprep.subr.bf16.mxu0 0
        %418 = vmatpush1.bf16.msra.mxu0 0
        %419 = vmatprep.subr.bf16.mxu0 0
        %420 = vmatpush1.bf16.msra.mxu0 0
        %421 = vmatprep.subr.bf16.mxu0 0
        %422 = vmatpush1.bf16.msra.mxu0 0
        %423 = vmatprep.subr.bf16.mxu0 0
        %424 = vmatpush1.bf16.msra.mxu0 0
        %425 = vmatprep.mubr.bf16.mxu0 %v381
        %426 = vmatmul.mubr.bf16.gmra.mrb[0].mxu0 %v281
        %v427 = vpop.f32.mrb[0].mxu0
        %v428 = vadd.f32 %v271, %v427
        %v429 = vpop.f32.mrb[0].mxu0
        %v430 = vadd.f32 %v272, %v429
        %v431 = vpop.f32.mrb[0].mxu0
        %v432 = vadd.f32 %v273, %v431
        %v433 = vpop.f32.mrb[0].mxu0
        %v434 = vadd.f32 %v274, %v433
        %435 = vdwg.mxu0
        %436 = vst [vmem:[%s245] sm:$0xff] %v428
        %437 = vst [vmem:[%s245 + $0x8] sm:$0xff] %v430
        %438 = vst [vmem:[%s245 + $0x10] sm:$0xff] %v432
        %439 = vst [vmem:[%s245 + $0x18] sm:$0xff] %v434
        %s440 = sand.u32 %s118, 1
        %s441 = scalar_lea.sflag [#allocation4], %s440
        %s442 = sand.u32 %s118, 1
        %s443 = smul.addr %s442, 32
        %s444 = scalar_lea.vmem [#allocation8], %s443
        // Predicated region
        $region45: #{tpu_custom_call.1} parent=31 // pred_check
          %p445 = pneg %p128
        $region46: #{tpu_custom_call.1} parent=31 // pred_check_branch
          %447 = sbr.rel (%p445) target = $region48
        $region47: #{tpu_custom_call.1} parent=31 // pred_region
          %s448 = smul.u32 2, %s26
          %s450 = ssub.s32 512, 512
          %451 = vsyncadd %s441, %s450
          %s452 = smul.addr %s448, 2
          %s453 = smul.addr %s25, 4
          %s454 = sadd.s32 %s452, %s453
          %s455 = smul.addr %s454, 128
          %s456 = scalar_lea.hbm %s3, %s455
          %s457 = sshll.u32 %s444, 4
          %s458 = int_to_ptr.vmem [resolvable:$true] %s457
          %463 = dma.vmem_to_hbm [thread:$0]  %s458, 512, %s456, %s441, 256, 256, 16
        $region48: #{tpu_custom_call.1} parent=31 // pred_fallthru
          _
      $region32: #{tpu_custom_call.1} parent=5 // pred_fallthru
        _
      %p464 = scmp.le.s32.totalorder 2, %s16
      // Predicated region
      $region49: #{tpu_custom_call.1} parent=5 // pred_check
        %p465 = pneg %p464
      $region50: #{tpu_custom_call.1} parent=5 // pred_check_branch
        %467 = sbr.rel (%p465) target = $region52
      $region51: #{tpu_custom_call.1} parent=5 // pred_region
        %s468 = ssub.s32 %s16, 2
        // Predicated region
        $region53: #{tpu_custom_call.1} parent=51 // pred_check
          %p469 = pneg %p134
        $region54: #{tpu_custom_call.1} parent=51 // pred_check_branch
          %471 = sbr.rel (%p469) target = $region56
        $region55: #{tpu_custom_call.1} parent=51 // pred_region
          %s472 = sand.u32 %s119, 1
          %s473 = scalar_lea.sflag [#allocation4], %s472
          %s474 = sand.u32 %s119, 1
          %s475 = smul.addr %s474, 32
          %s476 = scalar_lea.vmem [#allocation8], %s475
          %477 = dma.done %s473, 512
        $region56: #{tpu_custom_call.1} parent=51 // pred_fallthru
          _
      $region52: #{tpu_custom_call.1} parent=5 // pred_fallthru
        _
    $region6: #{tpu_custom_call.1} parent=1 // loop_footer
      %s20 = sadd.s32 1, %s16
    $region7: #{tpu_custom_call.1} parent=1 // loop_footer_branch
      %15 = sbr.rel target = $region3
    $region8: #{tpu_custom_call.1} parent=1 // loop_exit
      _
    %478 = vsyncpa [#allocation3], 1
    %s479 = scalar_lea.sflag [#allocation3], 1
    %480 = vsyncpa %s479, 1
    %481 = vsyncpa [#allocation6], 1
    %482 = vsyncpa [#allocation4], 1
    %s483 = scalar_lea.sflag [#allocation4], 1
    %484 = vsyncpa %s483, 1

</llo_original>
